<compile_context>
chip_gen: v5e
topology: v5e:2x2
jax: 0.10.0
libtpu: 0.0.40
codegen_flags: <defaults>
</compile_context>

<pallas_src>
import jax
import jax.numpy as jnp
import numpy as np
from jax import lax
from jax.experimental import pallas as pl
from jax.experimental.pallas import tpu as pltpu


def _backbone_update_kernel(x_ref, wT_ref, bias_ref, out_ref):
    # x_ref:    [tn, D]  residues on the sublane axis, native dtype
    # wT_ref:   [6, D]   transposed Linear weight (resident across grid steps)
    # bias_ref: [6, 1]   float32
    # out_ref:  [12, tn] rows 0..8 = rotation (row-major), rows 9..11 = t
    # Linear(node_dim -> 6): contract D with D so the result is lane-dense
    # [6, tn]; native-dtype operands go straight to the MXU, f32 accumulate.
    lin = lax.dot_general(
        wT_ref[...], x_ref[...],
        dimension_numbers=(((1,), (1,)), ((), ())),
        preferred_element_type=jnp.float32,
    ) + bias_ref[...]

    r0 = lin[0:1, :]
    r1 = lin[1:2, :]
    r2 = lin[2:3, :]

    # inv = 1 / sqrt(1 + |rot|^2)  (exact rsqrt on the EUP; no lane reduce).
    inv = lax.rsqrt(1.0 + r0 * r0 + r1 * r1 + r2 * r2)  # [1, tn]

    a = inv
    b = r0 * inv
    c = r1 * inv
    d = r2 * inv

    bb, cc, dd = b * b, c * c, d * d
    ab, ac, ad = a * b, a * c, a * d
    bc, bd, cd = b * c, b * d, c * d

    # Unit-quaternion identity (a^2+b^2+c^2+d^2 == 1) for the diagonals.
    out_ref[0:1, :] = 1.0 - 2.0 * (cc + dd)   # a^2+b^2-c^2-d^2
    out_ref[1:2, :] = 2.0 * (bc - ad)
    out_ref[2:3, :] = 2.0 * (bd + ac)
    out_ref[3:4, :] = 2.0 * (bc + ad)
    out_ref[4:5, :] = 1.0 - 2.0 * (bb + dd)   # a^2-b^2+c^2-d^2
    out_ref[5:6, :] = 2.0 * (cd - ab)
    out_ref[6:7, :] = 2.0 * (bd - ac)
    out_ref[7:8, :] = 2.0 * (cd + ab)
    out_ref[8:9, :] = 1.0 - 2.0 * (bb + cc)   # a^2-b^2-c^2+d^2
    out_ref[9:12, :] = lin[3:6, :]            # translation


def backbone_update(node_features, weight, bias, *, tn=None):
    """node_features: [B, N, D] (any float dtype), weight: [D, 6], bias: [6].

    Returns (R: [B, N, 3, 3], t: [B, N, 3]) in float32.
    """
    B, N, D = node_features.shape
    M = B * N
    itemsize = node_features.dtype.itemsize

    # --- Tile sizing over the residue axis -----------------------------------
    if tn is None:
        # Target a multi-MiB input block per grid step so the ~0.35 us per-step
        # pipeline overhead is amortized at v6e/v7x HBM bandwidths.
        target_block_bytes = 6 << 20
        tn = target_block_bytes // max(D * itemsize, 1)
        tn = max(512, min(8192, tn))
    tn = int(pl.cdiv(int(tn), 128)) * 128
    tn = max(128, min(tn, int(pl.cdiv(M, 128)) * 128))
    # Prefer >= 2 grid steps when there is enough work, so both v7x
    # TensorCores receive a tile under dimension_semantics=("parallel",).
    if M > 256 and pl.cdiv(M, tn) < 2:
        tn = int(pl.cdiv(int(pl.cdiv(M, 2)), 128)) * 128
    grid = (int(pl.cdiv(M, tn)),)

    # --- Layout plumbing: NO transpose / NO pad of the big input -------------
    x = node_features.reshape(M, D)                 # natural [M, D], native dtype
    wT = weight.T.astype(node_features.dtype)       # [6, D], MXU operand dtype
    b2 = bias.astype(jnp.float32).reshape(6, 1)     # [6, 1]

    # Scoped VMEM budget: double-buffered input + output blocks, plus margin.
    need = 2 * (tn * D * itemsize + 12 * tn * 4) + 6 * D * itemsize + (2 << 20)
    vmem_limit = int(min(64 << 20, max(32 << 20, need)))

    out = pl.pallas_call(
        _backbone_update_kernel,
        out_shape=jax.ShapeDtypeStruct((12, M), jnp.float32),
        grid_spec=pltpu.PrefetchScalarGridSpec(
            num_scalar_prefetch=0,
            grid=grid,
            in_specs=[
                pl.BlockSpec((tn, D), lambda i: (i, 0)),   # x tile (natural layout)
                pl.BlockSpec((6, D), lambda i: (0, 0)),    # wT (resident)
                pl.BlockSpec((6, 1), lambda i: (0, 0)),    # bias (resident)
            ],
            out_specs=pl.BlockSpec((12, tn), lambda i: (0, i)),
        ),
        compiler_params=pltpu.CompilerParams(
            dimension_semantics=("parallel",),
            vmem_limit_bytes=vmem_limit,
        ),
    )(x, wT, b2)

    outT = out.T                                    # [M, 12] (layout only)
    R = outT[:, :9].reshape(B, N, 3, 3)
    t = outT[:, 9:12].reshape(B, N, 3)
    return R, t


def _reference(node_features, weight, bias):
    lin = jnp.einsum("bnd,df->bnf", node_features.astype(jnp.float32),
                     weight.astype(jnp.float32)) + bias.astype(jnp.float32)
    rot, t = lin[..., :3], lin[..., 3:]
    norm = jnp.sqrt(1.0 + jnp.sum(rot ** 2, axis=-1, keepdims=True))
    a = (1.0 / norm)[..., 0]
    q = rot / norm
    b, c, d = q[..., 0], q[..., 1], q[..., 2]
    R = jnp.stack([
        a**2 + b**2 - c**2 - d**2, 2*b*c - 2*a*d, 2*b*d + 2*a*c,
        2*b*c + 2*a*d, a**2 - b**2 + c**2 - d**2, 2*c*d - 2*a*b,
        2*b*d - 2*a*c, 2*c*d + 2*a*b, a**2 - b**2 - c**2 + d**2,
    ], axis=-1).reshape(*a.shape, 3, 3)
    return R, t


if __name__ == "__main__":
    key = jax.random.PRNGKey(0)
    B, N, node_dim = 2, 8, 32
    k1, k2, k3 = jax.random.split(key, 3)

    node_features = jax.random.normal(k1, (B, N, node_dim), dtype=jnp.float32)
    # Deterministic Linear(node_dim, 6) params (PyTorch-style uniform init).
    bound = 1.0 / np.sqrt(node_dim)
    weight = jax.random.uniform(k2, (node_dim, 6), jnp.float32, -bound, bound)
    bias = jax.random.uniform(k3, (6,), jnp.float32, -bound, bound)

    R, t = backbone_update(node_features, weight, bias)
    jax.block_until_ready((R, t))

    R_ref, t_ref = _reference(node_features, weight, bias)
    np.testing.assert_allclose(np.asarray(R), np.asarray(R_ref), atol=1e-4, rtol=1e-4)
    np.testing.assert_allclose(np.asarray(t), np.asarray(t_ref), atol=1e-4, rtol=1e-4)

    print("KERNEL_OK")
</pallas_src>

<mosaic_0001>
module attributes {stable_mosaic.version = 11 : i64} {
  func.func @_backbone_update_kernel(%arg0: i32, %arg1: memref<128x32xf32, #tpu.memory_space<vmem>>, %arg2: memref<6x32xf32, #tpu.memory_space<vmem>>, %arg3: memref<6x1xf32, #tpu.memory_space<vmem>>, %arg4: memref<12x128xf32, #tpu.memory_space<vmem>>) attributes {dimension_semantics = [#tpu.dimension_semantics<parallel>], iteration_bounds = array<i64: 1>, scalar_prefetch = 0 : i64, scratch_operands = 0 : i64, tpu.core_type = #tpu.core_type<tc>, window_params = [{transform_indices = @transform_0, window_bounds = array<i64: 128, 32>}, {pipeline_mode = #tpu.pipeline_mode<synchronous>, transform_indices = @transform_1, window_bounds = array<i64: 6, 32>}, {pipeline_mode = #tpu.pipeline_mode<synchronous>, transform_indices = @transform_2, window_bounds = array<i64: 6, 1>}, {transform_indices = @transform_3, window_bounds = array<i64: 12, 128>}]} {
    %c0 = arith.constant 0 : index
    %c0_0 = arith.constant 0 : index
    %0 = vector.load %arg2[%c0, %c0_0] : memref<6x32xf32, #tpu.memory_space<vmem>>, vector<6x32xf32>
    %c0_1 = arith.constant 0 : index
    %c0_2 = arith.constant 0 : index
    %1 = vector.load %arg1[%c0_1, %c0_2] : memref<128x32xf32, #tpu.memory_space<vmem>>, vector<128x32xf32>
    %cst = arith.constant dense<0.000000e+00> : vector<6x128xf32>
    %2 = tpu.matmul %0, %1, %cst {dimension_numbers = #tpu.dot_dimension_numbers<[1], [1], [0], [0], [0, 0, 1, 0], [], []>} : vector<6x32xf32>, vector<128x32xf32>, vector<6x128xf32> -> vector<6x128xf32>
    %c0_3 = arith.constant 0 : index
    %c0_4 = arith.constant 0 : index
    %3 = vector.load %arg3[%c0_3, %c0_4] : memref<6x1xf32, #tpu.memory_space<vmem>>, vector<6x1xf32>
    %4 = vector.broadcast %3 : vector<6x1xf32> to vector<6x128xf32>
    %5 = arith.addf %2, %4 : vector<6x128xf32>
    %6 = vector.extract_strided_slice %5 {offsets = [0, 0], sizes = [1, 128], strides = [1, 1]} : vector<6x128xf32> to vector<1x128xf32>
    %7 = vector.extract_strided_slice %5 {offsets = [1, 0], sizes = [1, 128], strides = [1, 1]} : vector<6x128xf32> to vector<1x128xf32>
    %8 = vector.extract_strided_slice %5 {offsets = [2, 0], sizes = [1, 128], strides = [1, 1]} : vector<6x128xf32> to vector<1x128xf32>
    %9 = arith.mulf %6, %6 : vector<1x128xf32>
    %cst_5 = arith.constant 1.000000e+00 : f32
    %10 = vector.broadcast %cst_5 : f32 to vector<1x128xf32>
    %11 = arith.addf %10, %9 : vector<1x128xf32>
    %12 = arith.mulf %7, %7 : vector<1x128xf32>
    %13 = arith.addf %11, %12 : vector<1x128xf32>
    %14 = arith.mulf %8, %8 : vector<1x128xf32>
    %15 = arith.addf %13, %14 : vector<1x128xf32>
    %16 = math.rsqrt %15 : vector<1x128xf32>
    %17 = arith.mulf %6, %16 : vector<1x128xf32>
    %18 = arith.mulf %7, %16 : vector<1x128xf32>
    %19 = arith.mulf %8, %16 : vector<1x128xf32>
    %20 = arith.mulf %17, %17 : vector<1x128xf32>
    %21 = arith.mulf %18, %18 : vector<1x128xf32>
    %22 = arith.mulf %19, %19 : vector<1x128xf32>
    %23 = arith.mulf %16, %17 : vector<1x128xf32>
    %24 = arith.mulf %16, %18 : vector<1x128xf32>
    %25 = arith.mulf %16, %19 : vector<1x128xf32>
    %26 = arith.mulf %17, %18 : vector<1x128xf32>
    %27 = arith.mulf %17, %19 : vector<1x128xf32>
    %28 = arith.mulf %18, %19 : vector<1x128xf32>
    %29 = arith.addf %21, %22 : vector<1x128xf32>
    %cst_6 = arith.constant 2.000000e+00 : f32
    %30 = vector.broadcast %cst_6 : f32 to vector<1x128xf32>
    %31 = arith.mulf %30, %29 : vector<1x128xf32>
    %cst_7 = arith.constant 1.000000e+00 : f32
    %32 = vector.broadcast %cst_7 : f32 to vector<1x128xf32>
    %33 = arith.subf %32, %31 : vector<1x128xf32>
    %c0_8 = arith.constant 0 : index
    %c0_9 = arith.constant 0 : index
    %34 = vector.load %arg4[%c0_8, %c0_9] : memref<12x128xf32, #tpu.memory_space<vmem>>, vector<1x128xf32>
    tpu.vector_store %arg4[%c0_8, %c0_9], %33 {strides = array<i32>} : memref<12x128xf32, #tpu.memory_space<vmem>>, vector<1x128xf32>,
    %35 = arith.subf %26, %25 : vector<1x128xf32>
    %cst_10 = arith.constant 2.000000e+00 : f32
    %36 = vector.broadcast %cst_10 : f32 to vector<1x128xf32>
    %37 = arith.mulf %36, %35 : vector<1x128xf32>
    %c1 = arith.constant 1 : index
    %c0_11 = arith.constant 0 : index
    %38 = vector.load %arg4[%c1, %c0_11] : memref<12x128xf32, #tpu.memory_space<vmem>>, vector<1x128xf32>
    tpu.vector_store %arg4[%c1, %c0_11], %37 {strides = array<i32>} : memref<12x128xf32, #tpu.memory_space<vmem>>, vector<1x128xf32>,
    %39 = arith.addf %27, %24 : vector<1x128xf32>
    %cst_12 = arith.constant 2.000000e+00 : f32
    %40 = vector.broadcast %cst_12 : f32 to vector<1x128xf32>
    %41 = arith.mulf %40, %39 : vector<1x128xf32>
    %c2 = arith.constant 2 : index
    %c0_13 = arith.constant 0 : index
    %42 = vector.load %arg4[%c2, %c0_13] : memref<12x128xf32, #tpu.memory_space<vmem>>, vector<1x128xf32>
    tpu.vector_store %arg4[%c2, %c0_13], %41 {strides = array<i32>} : memref<12x128xf32, #tpu.memory_space<vmem>>, vector<1x128xf32>,
    %43 = arith.addf %26, %25 : vector<1x128xf32>
    %cst_14 = arith.constant 2.000000e+00 : f32
    %44 = vector.broadcast %cst_14 : f32 to vector<1x128xf32>
    %45 = arith.mulf %44, %43 : vector<1x128xf32>
    %c3 = arith.constant 3 : index
    %c0_15 = arith.constant 0 : index
    %46 = vector.load %arg4[%c3, %c0_15] : memref<12x128xf32, #tpu.memory_space<vmem>>, vector<1x128xf32>
    tpu.vector_store %arg4[%c3, %c0_15], %45 {strides = array<i32>} : memref<12x128xf32, #tpu.memory_space<vmem>>, vector<1x128xf32>,
    %47 = arith.addf %20, %22 : vector<1x128xf32>
    %cst_16 = arith.constant 2.000000e+00 : f32
    %48 = vector.broadcast %cst_16 : f32 to vector<1x128xf32>
    %49 = arith.mulf %48, %47 : vector<1x128xf32>
    %cst_17 = arith.constant 1.000000e+00 : f32
    %50 = vector.broadcast %cst_17 : f32 to vector<1x128xf32>
    %51 = arith.subf %50, %49 : vector<1x128xf32>
    %c4 = arith.constant 4 : index
    %c0_18 = arith.constant 0 : index
    %52 = vector.load %arg4[%c4, %c0_18] : memref<12x128xf32, #tpu.memory_space<vmem>>, vector<1x128xf32>
    tpu.vector_store %arg4[%c4, %c0_18], %51 {strides = array<i32>} : memref<12x128xf32, #tpu.memory_space<vmem>>, vector<1x128xf32>,
    %53 = arith.subf %28, %23 : vector<1x128xf32>
    %cst_19 = arith.constant 2.000000e+00 : f32
    %54 = vector.broadcast %cst_19 : f32 to vector<1x128xf32>
    %55 = arith.mulf %54, %53 : vector<1x128xf32>
    %c5 = arith.constant 5 : index
    %c0_20 = arith.constant 0 : index
    %56 = vector.load %arg4[%c5, %c0_20] : memref<12x128xf32, #tpu.memory_space<vmem>>, vector<1x128xf32>
    tpu.vector_store %arg4[%c5, %c0_20], %55 {strides = array<i32>} : memref<12x128xf32, #tpu.memory_space<vmem>>, vector<1x128xf32>,
    %57 = arith.subf %27, %24 : vector<1x128xf32>
    %cst_21 = arith.constant 2.000000e+00 : f32
    %58 = vector.broadcast %cst_21 : f32 to vector<1x128xf32>
    %59 = arith.mulf %58, %57 : vector<1x128xf32>
    %c6 = arith.constant 6 : index
    %c0_22 = arith.constant 0 : index
    %60 = vector.load %arg4[%c6, %c0_22] : memref<12x128xf32, #tpu.memory_space<vmem>>, vector<1x128xf32>
    tpu.vector_store %arg4[%c6, %c0_22], %59 {strides = array<i32>} : memref<12x128xf32, #tpu.memory_space<vmem>>, vector<1x128xf32>,
    %61 = arith.addf %28, %23 : vector<1x128xf32>
    %cst_23 = arith.constant 2.000000e+00 : f32
    %62 = vector.broadcast %cst_23 : f32 to vector<1x128xf32>
    %63 = arith.mulf %62, %61 : vector<1x128xf32>
    %c7 = arith.constant 7 : index
    %c0_24 = arith.constant 0 : index
    %64 = vector.load %arg4[%c7, %c0_24] : memref<12x128xf32, #tpu.memory_space<vmem>>, vector<1x128xf32>
    tpu.vector_store %arg4[%c7, %c0_24], %63 {strides = array<i32>} : memref<12x128xf32, #tpu.memory_space<vmem>>, vector<1x128xf32>,
    %65 = arith.addf %20, %21 : vector<1x128xf32>
    %cst_25 = arith.constant 2.000000e+00 : f32
    %66 = vector.broadcast %cst_25 : f32 to vector<1x128xf32>
    %67 = arith.mulf %66, %65 : vector<1x128xf32>
    %cst_26 = arith.constant 1.000000e+00 : f32
    %68 = vector.broadcast %cst_26 : f32 to vector<1x128xf32>
    %69 = arith.subf %68, %67 : vector<1x128xf32>
    %c8 = arith.constant 8 : index
    %c0_27 = arith.constant 0 : index
    %70 = vector.load %arg4[%c8, %c0_27] : memref<12x128xf32, #tpu.memory_space<vmem>>, vector<1x128xf32>
    tpu.vector_store %arg4[%c8, %c0_27], %69 {strides = array<i32>} : memref<12x128xf32, #tpu.memory_space<vmem>>, vector<1x128xf32>,
    %71 = vector.extract_strided_slice %5 {offsets = [3, 0], sizes = [3, 128], strides = [1, 1]} : vector<6x128xf32> to vector<3x128xf32>
    %c9 = arith.constant 9 : index
    %c0_28 = arith.constant 0 : index
    %72 = vector.load %arg4[%c9, %c0_28] : memref<12x128xf32, #tpu.memory_space<vmem>>, vector<3x128xf32>
    tpu.vector_store %arg4[%c9, %c0_28], %71 {strides = array<i32>} : memref<12x128xf32, #tpu.memory_space<vmem>>, vector<3x128xf32>,
    return
  }
  func.func @transform_0(%arg0: i32) -> (i32, i32) {
    %c0_i32 = arith.constant 0 : i32
    %c0_i32_0 = arith.constant 0 : i32
    return %arg0, %c0_i32 : i32, i32
  }
  func.func @transform_1(%arg0: i32) -> (i32, i32) {
    %c0_i32 = arith.constant 0 : i32
    %c0_i32_0 = arith.constant 0 : i32
    %c0_i32_1 = arith.constant 0 : i32
    return %c0_i32, %c0_i32_0 : i32, i32
  }
  func.func @transform_2(%arg0: i32) -> (i32, i32) {
    %c0_i32 = arith.constant 0 : i32
    %c0_i32_0 = arith.constant 0 : i32
    %c0_i32_1 = arith.constant 0 : i32
    return %c0_i32, %c0_i32_0 : i32, i32
  }
  func.func @transform_3(%arg0: i32) -> (i32, i32) {
    %c0_i32 = arith.constant 0 : i32
    %c0_i32_0 = arith.constant 0 : i32
    return %c0_i32, %arg0 : i32, i32
  }
}

</mosaic_0001>

<llo_original>
// kernel: tpu_custom_call.1
$region0: #{tpu_custom_call.1}
  #allocation0 [shape = 'u32[]', space=smem, size = 0x4, offset = 0x4, fixed_abs, tag = 'smem constant byte address 0x4 - core index']
  #allocation1 [shape = 'u32[72,128]{1,0:T(1,128)}', space=vmem, size = 0x9000, scoped, tag = 'internal scratch']
  %s0 = inlined_call_operand.hbm [shape: f32[16,32], index: 0, kind: input, shape index: {}]
  %s1 = inlined_call_operand.vmem [shape: f32[6,32], index: 1, kind: input, shape index: {}]
  %s2 = inlined_call_operand.vmem [shape: f32[6,1], index: 2, kind: input, shape index: {}]
  %s3 = inlined_call_operand.hbm [shape: f32[12,16], index: 3, kind: output, shape index: {}]
  %s4 = sld [smem:[#allocation0]]
  $region26: #{tpu_custom_call.1} parent=0
    _
  %s6 = ssub.s32 1, %s4
  %s7 = scalar_select 0, %s6, %s4
  $region1: #{tpu_custom_call.1} parent=0
    #allocation2 [shape = 'u8[65536]{0}', space=vmem, size = 0x10000, scoped, tag = 'input window, operand 0, single buffered']
    #allocation3 [shape = 's32[1]{0}', space=sflag, size = 0x4, scoped, tag = 'scoped memory for tpu_custom_call.1']
    #allocation4 [shape = 's32[1]{0}', space=sflag, size = 0x4, scoped, tag = 'scoped memory for tpu_custom_call.1']
    #allocation5 [shape = 'u8[8192]{0}', space=vmem, size = 0x2000, scoped, tag = 'output window, operand 0, single buffered']
    %8 = vsyncpa [#allocation3], 0
    %9 = vsyncpa [#allocation4], 0
    // Predicated region
    $region2: #{tpu_custom_call.1} parent=1 // pred_check
      _
    $region3: #{tpu_custom_call.1} parent=1 // pred_check_branch
      %11 = sbr.rel (0) target = $region5
    $region4: #{tpu_custom_call.1} parent=1 // pred_region
      %13 = vsyncadd [#allocation3], 1792
      %s14 = sshll.u32 %s0, 4
      %s15 = int_to_ptr.hbm [resolvable:$true] %s14
      %s16 = sshll.u32 [#allocation2], 4
      %s17 = int_to_ptr.vmem [resolvable:$true] %s16
      %22 = dma.hbm_to_vmem [thread:$0]  %s15, 256, %s17, [#allocation3], 128, 128, 8
    $region5: #{tpu_custom_call.1} parent=1 // pred_fallthru
      _
    // Predicated region
    $region6: #{tpu_custom_call.1} parent=1 // pred_check
      _
    $region7: #{tpu_custom_call.1} parent=1 // pred_check_branch
      %24 = sbr.rel (0) target = $region9
    $region8: #{tpu_custom_call.1} parent=1 // pred_region
      _
    $region9: #{tpu_custom_call.1} parent=1 // pred_fallthru
      _
    // Predicated region
    $region10: #{tpu_custom_call.1} parent=1 // pred_check
      _
    $region11: #{tpu_custom_call.1} parent=1 // pred_check_branch
      %26 = sbr.rel (0) target = $region13
    $region12: #{tpu_custom_call.1} parent=1 // pred_region
      _
    $region13: #{tpu_custom_call.1} parent=1 // pred_fallthru
      _
    // Predicated region
    $region14: #{tpu_custom_call.1} parent=1 // pred_check
      _
    $region15: #{tpu_custom_call.1} parent=1 // pred_check_branch
      %28 = sbr.rel (0) target = $region17
    $region16: #{tpu_custom_call.1} parent=1 // pred_region
      %30 = dma.done [#allocation3], 2048
    $region17: #{tpu_custom_call.1} parent=1 // pred_fallthru
      _
    %v31 = vld [vmem:[%s1] sm:$0x3f]
    %v32 = vld [vmem:[#allocation2] sm:$0xff]
    %v33 = vld [vmem:[#allocation2 + $0x8] sm:$0xff]
    %v34 = vld [vmem:[#allocation2 + $0x10] sm:$0xff]
    %v35 = vld [vmem:[#allocation2 + $0x18] sm:$0xff]
    %v36 = vld [vmem:[#allocation2 + $0x20] sm:$0xff]
    %v37 = vld [vmem:[#allocation2 + $0x28] sm:$0xff]
    %v38 = vld [vmem:[#allocation2 + $0x30] sm:$0xff]
    %v39 = vld [vmem:[#allocation2 + $0x38] sm:$0xff]
    %v40 = vld [vmem:[#allocation2 + $0x40] sm:$0xff]
    %v41 = vld [vmem:[#allocation2 + $0x48] sm:$0xff]
    %v42 = vld [vmem:[#allocation2 + $0x50] sm:$0xff]
    %v43 = vld [vmem:[#allocation2 + $0x58] sm:$0xff]
    %v44 = vld [vmem:[#allocation2 + $0x60] sm:$0xff]
    %v45 = vld [vmem:[#allocation2 + $0x68] sm:$0xff]
    %v46 = vld [vmem:[#allocation2 + $0x70] sm:$0xff]
    %v47 = vld [vmem:[#allocation2 + $0x78] sm:$0xff]
    %v48 = vld [vmem:[%s2] sm:$0x3f]
    %50 = vset.pattern.permute.xlu0 0
    %51 = vperm.xlu0 %50, %v48
    %v52 = vpop.permute.xlu0 %51
    %vm54 = vcmask 261120
    %v56 = vsel %vm54, %v31, 0
    %v59 = vsel %vm54, %v32, 0
    %v62 = vsel %vm54, %v33, 0
    %v65 = vsel %vm54, %v34, 0
    %v68 = vsel %vm54, %v35, 0
    %v71 = vsel %vm54, %v36, 0
    %v74 = vsel %vm54, %v37, 0
    %v77 = vsel %vm54, %v38, 0
    %v80 = vsel %vm54, %v39, 0
    %v83 = vsel %vm54, %v40, 0
    %v86 = vsel %vm54, %v41, 0
    %v89 = vsel %vm54, %v42, 0
    %v92 = vsel %vm54, %v43, 0
    %v95 = vsel %vm54, %v44, 0
    %v98 = vsel %vm54, %v45, 0
    %v101 = vsel %vm54, %v46, 0
    %v104 = vsel %vm54, %v47, 0
    %106 = vmatpush.xpose.msra.mxu0 %v104
    %107 = vmatpush.xpose.msra.mxu0 %v101
    %108 = vmatpush.xpose.msra.mxu0 %v98
    %109 = vmatpush.xpose.msra.mxu0 %v95
    %110 = vmatpush.xpose.msra.mxu0 %v92
    %111 = vmatpush.xpose.msra.mxu0 %v89
    %112 = vmatpush.xpose.msra.mxu0 %v86
    %113 = vmatpush.xpose.msra.mxu0 %v83
    %114 = vmatpush.xpose.msra.mxu0 %v80
    %115 = vmatpush.xpose.msra.mxu0 %v77
    %116 = vmatpush.xpose.msra.mxu0 %v74
    %117 = vmatpush.xpose.msra.mxu0 %v71
    %118 = vmatpush.xpose.msra.mxu0 %v68
    %119 = vmatpush.xpose.msra.mxu0 %v65
    %120 = vmatpush.xpose.msra.mxu0 %v62
    %121 = vmatpush.xpose.msra.mxu0 %v59
    %122 = vmatmul.f32.gmra.mxu0 %v56
    %v123 = vpop.f32.mrf.mxu0
    %v124 = vadd.f32 %v52, %v123
    %125 = vdwg.mxu0
    %v126 = vmul.f32 %v124, %v124
    %v127 = vadd.f32 %v126, 1.0
    %v129 = vrot.slane %v126, 1
    %v131 = vadd.f32 %v127, %v129
    %v132 = vrot.slane %v126, 2
    %v134 = vadd.f32 %v131, %v132
    %v135 = vrsqrt.pop %v134
    %v136 = vmul.f32 %v135, %v134
    %v137 = vmul.f32 %v136, %v135
    %v138 = vmul.f32 0.5, %v137
    %v139 = vsub.f32 1.5, %v138
    %v140 = vmul.f32 %v135, %v139
    %vm141 = vweird.f32 %v134
    %vm142 = vweird.f32 %v135
    %vm143 = vmor %vm141, %vm142
    %v144 = vsel %vm143, %v135, %v140
    %v145 = vmul.f32 %v124, %v144
    %v147 = vrot.slane %v144, 7
    %v149 = vmul.f32 %v124, %v147
    %v150 = vrot.slane %v144, 6
    %v152 = vmul.f32 %v124, %v150
    %v153 = vmul.f32 %v145, %v145
    %v154 = vmul.f32 %v149, %v149
    %v155 = vmul.f32 %v152, %v152
    %v156 = vmul.f32 %v144, %v145
    %v158 = vrot.slane %v149, 1
    %v160 = vmul.f32 %v144, %v158
    %v162 = vrot.slane %v152, 2
    %v164 = vmul.f32 %v144, %v162
    %v165 = vmul.f32 %v145, %v158
    %v166 = vmul.f32 %v145, %v162
    %v167 = vrot.slane %v152, 1
    %v169 = vmul.f32 %v149, %v167
    %v171 = vrot.slane %v155, 1
    %v173 = vadd.f32 %v154, %v171
    %v174 = vmul.f32 %v173, 2.0
    %v175 = vsub.f32 1.0, %v174
    %176 = vst [vmem:[#allocation5 - $0x1] sm:$0x2] %v175
    %v177 = vsub.f32 %v165, %v164
    %v178 = vmul.f32 %v177, 2.0
    %179 = vst [vmem:[#allocation5 + $0x1] sm:$0x1] %v178
    %v180 = vadd.f32 %v166, %v160
    %v181 = vmul.f32 %v180, 2.0
    %182 = vst [vmem:[#allocation5 + $0x2] sm:$0x1] %v181
    %v183 = vadd.f32 %v165, %v164
    %v184 = vmul.f32 %v183, 2.0
    %185 = vst [vmem:[#allocation5 + $0x3] sm:$0x1] %v184
    %v186 = vrot.slane %v155, 2
    %v188 = vadd.f32 %v153, %v186
    %v189 = vmul.f32 %v188, 2.0
    %v190 = vsub.f32 1.0, %v189
    %191 = vst [vmem:[#allocation5 + $0x4] sm:$0x1] %v190
    %v193 = vrot.slane %v156, 7
    %v195 = vsub.f32 %v169, %v193
    %v196 = vmul.f32 %v195, 2.0
    %197 = vst [vmem:[#allocation5 + $0x4] sm:$0x2] %v196
    %v198 = vsub.f32 %v166, %v160
    %v199 = vmul.f32 %v198, 2.0
    %200 = vst [vmem:[#allocation5 + $0x6] sm:$0x1] %v199
    %v201 = vadd.f32 %v169, %v193
    %v202 = vmul.f32 %v201, 2.0
    %203 = vst [vmem:[#allocation5 + $0x6] sm:$0x2] %v202
    %v205 = vrot.slane %v154, 1
    %v207 = vadd.f32 %v153, %v205
    %v208 = vmul.f32 %v207, 2.0
    %v209 = vsub.f32 1.0, %v208
    %210 = vst [vmem:[#allocation5 + $0x8] sm:$0x1] %v209
    %211 = vst [vmem:[#allocation5 + $0x6] sm:$0x38] %v124
    // Predicated region
    $region18: #{tpu_custom_call.1} parent=1 // pred_check
      _
    $region19: #{tpu_custom_call.1} parent=1 // pred_check_branch
      %213 = sbr.rel (0) target = $region21
    $region20: #{tpu_custom_call.1} parent=1 // pred_region
      %215 = vsyncadd [#allocation4], 0
      %s216 = sshll.u32 [#allocation5], 4
      %s217 = int_to_ptr.vmem [resolvable:$true] %s216
      %s218 = sshll.u32 %s3, 4
      %s219 = int_to_ptr.hbm [resolvable:$true] %s218
      %224 = dma.vmem_to_hbm [thread:$0]  %s217, 256, %s219, [#allocation4], 128, 128, 8
    $region21: #{tpu_custom_call.1} parent=1 // pred_fallthru
      _
    // Predicated region
    $region22: #{tpu_custom_call.1} parent=1 // pred_check
      _
    $region23: #{tpu_custom_call.1} parent=1 // pred_check_branch
      %226 = sbr.rel (0) target = $region25
    $region24: #{tpu_custom_call.1} parent=1 // pred_region
      %228 = dma.done [#allocation4], 256
    $region25: #{tpu_custom_call.1} parent=1 // pred_fallthru
      _
    %229 = vsyncpa [#allocation3], 1
    %230 = vsyncpa [#allocation4], 1

</llo_original>
